<compile_context>
chip_gen: v5e
topology: v5e:2x2
jax: 0.10.0
libtpu: 0.0.40
codegen_flags: <defaults>
</compile_context>

<pallas_src>
import functools

import jax
import jax.numpy as jnp
from jax.experimental import pallas as pl
from jax.experimental.pallas import tpu as pltpu


# ----------------------------- main-path kernel -----------------------------

def se_block_kernel(x_ref, w1t_ref, b1_ref, w2t_ref, b2_ref, o_ref, *, inv_hw):
    # x block: (nb, C, HW)   w1t: (C, Cr)  b1: (1, Cr)   w2t: (Cr, C)  b2: (1, C)
    # squeeze: global average pool (accumulate in f32 even for bf16 inputs).
    s = jnp.sum(x_ref[...].astype(jnp.float32), axis=-1) * inv_hw        # (nb, C)

    # excitation: fc1 (1x1 conv) + ReLU, fc2 (1x1 conv) + sigmoid, batched on MXU.
    z1 = jnp.dot(s, w1t_ref[...], preferred_element_type=jnp.float32)
    z1 = jnp.maximum(z1 + b1_ref[...], 0.0)                              # (nb, Cr)
    z2 = jnp.dot(z1, w2t_ref[...], preferred_element_type=jnp.float32)
    z2 = jax.nn.sigmoid(z2 + b2_ref[...])                                # (nb, C)

    # recalibrate: re-read the block (don't hold it live across the excitation).
    o_ref[...] = (x_ref[...] * z2[:, :, None]).astype(o_ref.dtype)


# ----------------------- HW-chunked fallback kernels -------------------------

def _pool_kernel(x_ref, o_ref, *, inv_hw, hw, hwc):
    # Accumulate the pooled mean over HW chunks; out block (1, 1, C) stays
    # resident across the (last, "arbitrary") h axis.
    h = pl.program_id(1)

    @pl.when(h == 0)
    def _():
        o_ref[...] = jnp.zeros_like(o_ref)

    x = x_ref[...].astype(jnp.float32)                                   # (1, C, hwc)
    # Mask lanes beyond the true HW in the (possibly partial) last chunk.
    lane = jax.lax.broadcasted_iota(jnp.int32, x.shape, 2) + h * hwc
    x = jnp.where(lane < hw, x, 0.0)
    o_ref[...] += jnp.sum(x, axis=-1)[:, None, :]                        # (1, 1, C)

    @pl.when(h == pl.num_programs(1) - 1)
    def _():
        o_ref[...] *= inv_hw


def _scale_kernel(pooled_ref, x_ref, w1t_ref, b1_ref, w2t_ref, b2_ref, o_ref):
    # Recompute the tiny excitation per chunk (hidden under the block DMA)
    # and apply the channel-wise scale.
    s = pooled_ref[0]                                                    # (1, C)
    z1 = jnp.dot(s, w1t_ref[...], preferred_element_type=jnp.float32)
    z1 = jnp.maximum(z1 + b1_ref[...], 0.0)                              # (1, Cr)
    z2 = jnp.dot(z1, w2t_ref[...], preferred_element_type=jnp.float32)
    z2 = jax.nn.sigmoid(z2 + b2_ref[...])                                # (1, C)
    o_ref[...] = (x_ref[...] * z2[:, :, None]).astype(o_ref.dtype)


def _se_block_hw_chunked(x_flat, w1t, b1r, w2t, b2r, budget, vmem_limit):
    N, C, HW = x_flat.shape
    Cr = w1t.shape[1]
    itemsize = x_flat.dtype.itemsize

    # Lane-aligned spatial chunk that fits the budget (in + out, double-buffered).
    hwc = max(128, (budget // (4 * C * itemsize)) // 128 * 128)
    hwc = min(hwc, HW)
    n_hw = pl.cdiv(HW, hwc)

    pooled = pl.pallas_call(
        functools.partial(_pool_kernel, inv_hw=1.0 / HW, hw=HW, hwc=hwc),
        out_shape=jax.ShapeDtypeStruct((N, 1, C), jnp.float32),
        grid_spec=pltpu.PrefetchScalarGridSpec(
            num_scalar_prefetch=0,
            grid=(N, n_hw),
            in_specs=[pl.BlockSpec((1, C, hwc), lambda n, h: (n, 0, h))],
            out_specs=pl.BlockSpec((1, 1, C), lambda n, h: (n, 0, 0)),
        ),
        compiler_params=pltpu.CompilerParams(
            dimension_semantics=("parallel", "arbitrary"),
            vmem_limit_bytes=vmem_limit,
        ),
    )(x_flat)

    out_flat = pl.pallas_call(
        _scale_kernel,
        out_shape=jax.ShapeDtypeStruct((N, C, HW), x_flat.dtype),
        grid_spec=pltpu.PrefetchScalarGridSpec(
            num_scalar_prefetch=0,
            grid=(N, n_hw),
            in_specs=[
                pl.BlockSpec((1, 1, C), lambda n, h: (n, 0, 0)),
                pl.BlockSpec((1, C, hwc), lambda n, h: (n, 0, h)),
                pl.BlockSpec((C, Cr), lambda n, h: (0, 0)),
                pl.BlockSpec((1, Cr), lambda n, h: (0, 0)),
                pl.BlockSpec((Cr, C), lambda n, h: (0, 0)),
                pl.BlockSpec((1, C), lambda n, h: (0, 0)),
            ],
            out_specs=pl.BlockSpec((1, C, hwc), lambda n, h: (n, 0, h)),
        ),
        compiler_params=pltpu.CompilerParams(
            dimension_semantics=("parallel", "parallel"),
            vmem_limit_bytes=vmem_limit,
        ),
    )(pooled, x_flat, w1t, b1r, w2t, b2r)
    return out_flat


# --------------------------------- wrapper -----------------------------------

def se_block(x, w1, b1, w2, b2, *, vmem_budget_bytes=None):
    """x: (N, C, H, W); w1: (Cr, C); b1: (Cr,); w2: (C, Cr); b2: (C,)."""
    N, C, H, W = x.shape
    HW = H * W
    Cr = w1.shape[0]
    itemsize = x.dtype.itemsize

    # Per-generation VMEM sizing.
    kind = jax.devices()[0].device_kind.lower()
    is_v7x = "v7" in kind
    if "v5" in kind or "v6" in kind:
        vmem_limit = 96 * 1024 * 1024          # 128 MiB physical -> roomy limit
        default_budget = 80 * 1024 * 1024
    else:                                       # v7x (64 MiB per TC) or unknown
        vmem_limit = 48 * 1024 * 1024
        default_budget = 40 * 1024 * 1024
    budget = default_budget if vmem_budget_bytes is None else vmem_budget_bytes

    # Free reshapes; HW stays un-padded and the batch is not padded either.
    x_flat = x.reshape(N, C, HW)
    w1t = w1.T                                  # (C, Cr)
    w2t = w2.T                                  # (Cr, C)
    b1r = b1.reshape(1, Cr)
    b2r = b2.reshape(1, C)

    bytes_per_batch = C * HW * itemsize

    if 4 * bytes_per_batch > budget:
        # Even a single batch element (double-buffered in + out) exceeds the
        # budget -> HW-chunked two-pass fallback (~1.5x HBM traffic, robust).
        out_flat = _se_block_hw_chunked(x_flat, w1t, b1r, w2t, b2r,
                                        budget, vmem_limit)
        return out_flat.reshape(N, C, H, W)

    # ---- main path: one grid step per batch block ----
    nb_max = max(1, budget // (4 * bytes_per_batch))
    nb = min(nb_max, N)

    # Prefer ~8 grid steps so the scale/writeback overlaps the next block DMA,
    # but only while each block still moves >= ~1 MiB.
    desired_g = min(N, 8)
    while desired_g > 1 and pl.cdiv(N, desired_g) * bytes_per_batch < (1 << 20):
        desired_g -= 1
    if desired_g > 1:
        nb = min(nb, max(1, N // desired_g))

    # v7x has 2 TensorCores: prefer an even number of grid steps.
    if is_v7x and N > 1 and pl.cdiv(N, nb) % 2 == 1:
        for cand in range(nb, 0, -1):
            if pl.cdiv(N, cand) % 2 == 0:
                nb = cand
                break

    g = pl.cdiv(N, nb)   # last block may be partial: OOB rows in, writes dropped

    kernel = functools.partial(se_block_kernel, inv_hw=1.0 / HW)
    out_flat = pl.pallas_call(
        kernel,
        out_shape=jax.ShapeDtypeStruct((N, C, HW), x.dtype),
        grid_spec=pltpu.PrefetchScalarGridSpec(
            num_scalar_prefetch=0,
            grid=(g,),
            in_specs=[
                pl.BlockSpec((nb, C, HW), lambda n: (n, 0, 0)),
                pl.BlockSpec((C, Cr), lambda n: (0, 0)),
                pl.BlockSpec((1, Cr), lambda n: (0, 0)),
                pl.BlockSpec((Cr, C), lambda n: (0, 0)),
                pl.BlockSpec((1, C), lambda n: (0, 0)),
            ],
            out_specs=pl.BlockSpec((nb, C, HW), lambda n: (n, 0, 0)),
        ),
        compiler_params=pltpu.CompilerParams(
            dimension_semantics=("parallel",),
            vmem_limit_bytes=vmem_limit,
        ),
    )(x_flat, w1t, b1r, w2t, b2r)

    return out_flat.reshape(N, C, H, W)


# -------------------------------- reference ----------------------------------

def se_block_reference(x, w1, b1, w2, b2):
    z = jnp.mean(x, axis=(2, 3), keepdims=True)                  # (N, C, 1, 1)
    z = jnp.einsum('oc,nchw->nohw', w1, z) + b1[None, :, None, None]
    z = jnp.maximum(z, 0.0)
    z = jnp.einsum('oc,nchw->nohw', w2, z) + b2[None, :, None, None]
    z = jax.nn.sigmoid(z)
    return x * z


if __name__ == "__main__":
    # Small shapes consistent with the module: batch=2, channels=8,
    # reduction=4 (-> hidden 2), spatial 16x16.
    N, C, H, W = 2, 8, 16, 16
    reduction = 4
    Cr = C // reduction

    key = jax.random.PRNGKey(0)
    kx, kw1, kb1, kw2, kb2 = jax.random.split(key, 5)

    x = jax.random.normal(kx, (N, C, H, W), dtype=jnp.float32)
    # 1x1 conv weights squeezed to 2D.
    w1 = jax.random.normal(kw1, (Cr, C), dtype=jnp.float32) * 0.2
    b1 = jax.random.normal(kb1, (Cr,), dtype=jnp.float32) * 0.1
    w2 = jax.random.normal(kw2, (C, Cr), dtype=jnp.float32) * 0.2
    b2 = jax.random.normal(kb2, (C,), dtype=jnp.float32) * 0.1

    ref = se_block_reference(x, w1, b1, w2, b2)

    # 1) Main path (default budget): single / few batch blocks.
    out = jax.block_until_ready(se_block(x, w1, b1, w2, b2))
    assert out.shape == (N, C, H, W)
    assert jnp.allclose(out, ref, atol=1e-5, rtol=1e-5), "main path mismatch"

    # 2) HW-chunked fallback (forced tiny budget): exercises the two-pass path.
    out_fb = jax.block_until_ready(
        se_block(x, w1, b1, w2, b2, vmem_budget_bytes=16 * 1024))
    assert jnp.allclose(out_fb, ref, atol=1e-5, rtol=1e-5), "fallback mismatch"

    # 3) Multi-step main path with a partial (un-padded) last batch block.
    N3 = 3
    x3 = jax.random.normal(jax.random.PRNGKey(1), (N3, C, H, W), dtype=jnp.float32)
    ref3 = se_block_reference(x3, w1, b1, w2, b2)
    out3 = jax.block_until_ready(
        se_block(x3, w1, b1, w2, b2, vmem_budget_bytes=64 * 1024))
    assert jnp.allclose(out3, ref3, atol=1e-5, rtol=1e-5), "partial-block mismatch"

    print("KERNEL_OK")
</pallas_src>

<mosaic_0001>
module attributes {stable_mosaic.version = 11 : i64} {
  func.func @se_block_kernel(%arg0: i32, %arg1: memref<2x8x256xf32, #tpu.memory_space<vmem>>, %arg2: memref<8x2xf32, #tpu.memory_space<vmem>>, %arg3: memref<1x2xf32, #tpu.memory_space<vmem>>, %arg4: memref<2x8xf32, #tpu.memory_space<vmem>>, %arg5: memref<1x8xf32, #tpu.memory_space<vmem>>, %arg6: memref<2x8x256xf32, #tpu.memory_space<vmem>>) attributes {dimension_semantics = [#tpu.dimension_semantics<parallel>], iteration_bounds = array<i64: 1>, scalar_prefetch = 0 : i64, scratch_operands = 0 : i64, tpu.core_type = #tpu.core_type<tc>, window_params = [{transform_indices = @transform_0, window_bounds = array<i64: 2, 8, 256>}, {pipeline_mode = #tpu.pipeline_mode<synchronous>, transform_indices = @transform_1, window_bounds = array<i64: 8, 2>}, {pipeline_mode = #tpu.pipeline_mode<synchronous>, transform_indices = @transform_2, window_bounds = array<i64: 1, 2>}, {pipeline_mode = #tpu.pipeline_mode<synchronous>, transform_indices = @transform_3, window_bounds = array<i64: 2, 8>}, {pipeline_mode = #tpu.pipeline_mode<synchronous>, transform_indices = @transform_4, window_bounds = array<i64: 1, 8>}, {transform_indices = @transform_5, window_bounds = array<i64: 2, 8, 256>}]} {
    %c0 = arith.constant 0 : index
    %c0_0 = arith.constant 0 : index
    %c0_1 = arith.constant 0 : index
    %0 = vector.load %arg1[%c0, %c0_0, %c0_1] : memref<2x8x256xf32, #tpu.memory_space<vmem>>, vector<2x8x256xf32>
    %cst = arith.constant dense<0.000000e+00> : vector<2x8xf32>
    %1 = vector.multi_reduction <add>, %0, %cst [2] : vector<2x8x256xf32> to vector<2x8xf32>
    %cst_2 = arith.constant 3.906250e-03 : f32
    %2 = vector.broadcast %cst_2 : f32 to vector<2x8xf32>
    %3 = arith.mulf %1, %2 : vector<2x8xf32>
    %c0_3 = arith.constant 0 : index
    %c0_4 = arith.constant 0 : index
    %4 = vector.load %arg2[%c0_3, %c0_4] : memref<8x2xf32, #tpu.memory_space<vmem>>, vector<8x2xf32>
    %cst_5 = arith.constant dense<0.000000e+00> : vector<2x2xf32>
    %5 = tpu.matmul %3, %4, %cst_5 {dimension_numbers = #tpu.dot_dimension_numbers<[1], [0], [0], [1], [0, 0, 1, 1], [], []>} : vector<2x8xf32>, vector<8x2xf32>, vector<2x2xf32> -> vector<2x2xf32>
    %c0_6 = arith.constant 0 : index
    %c0_7 = arith.constant 0 : index
    %6 = vector.load %arg3[%c0_6, %c0_7] : memref<1x2xf32, #tpu.memory_space<vmem>>, vector<1x2xf32>
    %7 = vector.broadcast %6 : vector<1x2xf32> to vector<2x2xf32>
    %8 = arith.addf %5, %7 : vector<2x2xf32>
    %cst_8 = arith.constant 0.000000e+00 : f32
    %9 = vector.broadcast %cst_8 : f32 to vector<2x2xf32>
    %10 = arith.maximumf %8, %9 : vector<2x2xf32>
    %c0_9 = arith.constant 0 : index
    %c0_10 = arith.constant 0 : index
    %11 = vector.load %arg4[%c0_9, %c0_10] : memref<2x8xf32, #tpu.memory_space<vmem>>, vector<2x8xf32>
    %cst_11 = arith.constant dense<0.000000e+00> : vector<2x8xf32>
    %12 = tpu.matmul %10, %11, %cst_11 {dimension_numbers = #tpu.dot_dimension_numbers<[1], [0], [0], [1], [0, 0, 1, 1], [], []>} : vector<2x2xf32>, vector<2x8xf32>, vector<2x8xf32> -> vector<2x8xf32>
    %c0_12 = arith.constant 0 : index
    %c0_13 = arith.constant 0 : index
    %13 = vector.load %arg5[%c0_12, %c0_13] : memref<1x8xf32, #tpu.memory_space<vmem>>, vector<1x8xf32>
    %14 = vector.broadcast %13 : vector<1x8xf32> to vector<2x8xf32>
    %15 = arith.addf %12, %14 : vector<2x8xf32>
    %16 = arith.negf %15 : vector<2x8xf32>
    %17 = math.exp %16 : vector<2x8xf32>
    %cst_14 = arith.constant 1.000000e+00 : f32
    %18 = vector.broadcast %cst_14 : f32 to vector<2x8xf32>
    %19 = arith.addf %18, %17 : vector<2x8xf32>
    %20 = arith.divf %18, %19 : vector<2x8xf32>
    %c0_15 = arith.constant 0 : index
    %c0_16 = arith.constant 0 : index
    %c0_17 = arith.constant 0 : index
    %21 = vector.load %arg1[%c0_15, %c0_16, %c0_17] : memref<2x8x256xf32, #tpu.memory_space<vmem>>, vector<2x8x256xf32>
    %22 = vector.shape_cast %20 : vector<2x8xf32> to vector<2x8x1xf32>
    %23 = vector.broadcast %22 : vector<2x8x1xf32> to vector<2x8x256xf32>
    %24 = arith.mulf %21, %23 : vector<2x8x256xf32>
    %c0_18 = arith.constant 0 : index
    %c0_19 = arith.constant 0 : index
    %c0_20 = arith.constant 0 : index
    %25 = vector.load %arg6[%c0_18, %c0_19, %c0_20] : memref<2x8x256xf32, #tpu.memory_space<vmem>>, vector<2x8x256xf32>
    tpu.vector_store %arg6[%c0_18, %c0_19, %c0_20], %24 {strides = array<i32>} : memref<2x8x256xf32, #tpu.memory_space<vmem>>, vector<2x8x256xf32>,
    return
  }
  func.func @transform_0(%arg0: i32) -> (i32, i32, i32) {
    %c0_i32 = arith.constant 0 : i32
    %c0_i32_0 = arith.constant 0 : i32
    %c0_i32_1 = arith.constant 0 : i32
    return %arg0, %c0_i32, %c0_i32_0 : i32, i32, i32
  }
  func.func @transform_1(%arg0: i32) -> (i32, i32) {
    %c0_i32 = arith.constant 0 : i32
    %c0_i32_0 = arith.constant 0 : i32
    %c0_i32_1 = arith.constant 0 : i32
    return %c0_i32, %c0_i32_0 : i32, i32
  }
  func.func @transform_2(%arg0: i32) -> (i32, i32) {
    %c0_i32 = arith.constant 0 : i32
    %c0_i32_0 = arith.constant 0 : i32
    %c0_i32_1 = arith.constant 0 : i32
    return %c0_i32, %c0_i32_0 : i32, i32
  }
  func.func @transform_3(%arg0: i32) -> (i32, i32) {
    %c0_i32 = arith.constant 0 : i32
    %c0_i32_0 = arith.constant 0 : i32
    %c0_i32_1 = arith.constant 0 : i32
    return %c0_i32, %c0_i32_0 : i32, i32
  }
  func.func @transform_4(%arg0: i32) -> (i32, i32) {
    %c0_i32 = arith.constant 0 : i32
    %c0_i32_0 = arith.constant 0 : i32
    %c0_i32_1 = arith.constant 0 : i32
    return %c0_i32, %c0_i32_0 : i32, i32
  }
  func.func @transform_5(%arg0: i32) -> (i32, i32, i32) {
    %c0_i32 = arith.constant 0 : i32
    %c0_i32_0 = arith.constant 0 : i32
    %c0_i32_1 = arith.constant 0 : i32
    return %arg0, %c0_i32, %c0_i32_0 : i32, i32, i32
  }
}

</mosaic_0001>

<llo_original>
// kernel: tpu_custom_call.1
$region0: #{tpu_custom_call.1}
  #allocation0 [shape = 'u32[]', space=smem, size = 0x4, offset = 0x4, fixed_abs, tag = 'smem constant byte address 0x4 - core index']
  #allocation1 [shape = 'u32[72,128]{1,0:T(1,128)}', space=vmem, size = 0x9000, scoped, tag = 'internal scratch']
  %s0 = inlined_call_operand.hbm [shape: f32[2,8,256], index: 0, kind: input, shape index: {}]
  %s1 = inlined_call_operand.vmem [shape: f32[8,2], index: 1, kind: input, shape index: {}]
  %s2 = inlined_call_operand.vmem [shape: f32[1,2], index: 2, kind: input, shape index: {}]
  %s3 = inlined_call_operand.vmem [shape: f32[2,8], index: 3, kind: input, shape index: {}]
  %s4 = inlined_call_operand.vmem [shape: f32[1,8], index: 4, kind: input, shape index: {}]
  %s5 = inlined_call_operand.hbm [shape: f32[2,8,256], index: 5, kind: output, shape index: {}]
  %s6 = sld [smem:[#allocation0]]
  $region34: #{tpu_custom_call.1} parent=0
    _
  %s8 = ssub.s32 1, %s6
  %s9 = scalar_select 0, %s8, %s6
  $region1: #{tpu_custom_call.1} parent=0
    #allocation2 [shape = 'u8[16384]{0}', space=vmem, size = 0x4000, scoped, tag = 'input window, operand 0, single buffered']
    #allocation3 [shape = 's32[1]{0}', space=sflag, size = 0x4, scoped, tag = 'scoped memory for tpu_custom_call.1']
    #allocation4 [shape = 's32[1]{0}', space=sflag, size = 0x4, scoped, tag = 'scoped memory for tpu_custom_call.1']
    #allocation5 [shape = 'u8[16384]{0}', space=vmem, size = 0x4000, scoped, tag = 'output window, operand 0, single buffered']
    %10 = vsyncpa [#allocation3], 0
    %11 = vsyncpa [#allocation4], 0
    // Predicated region
    $region2: #{tpu_custom_call.1} parent=1 // pred_check
      _
    $region3: #{tpu_custom_call.1} parent=1 // pred_check_branch
      %13 = sbr.rel (0) target = $region5
    $region4: #{tpu_custom_call.1} parent=1 // pred_region
      %15 = vsyncadd [#allocation3], 0
      %s16 = sshll.u32 %s0, 4
      %s17 = int_to_ptr.hbm [resolvable:$true] %s16
      %s18 = sshll.u32 [#allocation2], 4
      %s19 = int_to_ptr.vmem [resolvable:$true] %s18
      %24 = dma.hbm_to_vmem [thread:$0]  %s17, 512, %s19, [#allocation3], 256, 256, 16
    $region5: #{tpu_custom_call.1} parent=1 // pred_fallthru
      _
    // Predicated region
    $region6: #{tpu_custom_call.1} parent=1 // pred_check
      _
    $region7: #{tpu_custom_call.1} parent=1 // pred_check_branch
      %26 = sbr.rel (0) target = $region9
    $region8: #{tpu_custom_call.1} parent=1 // pred_region
      _
    $region9: #{tpu_custom_call.1} parent=1 // pred_fallthru
      _
    // Predicated region
    $region10: #{tpu_custom_call.1} parent=1 // pred_check
      _
    $region11: #{tpu_custom_call.1} parent=1 // pred_check_branch
      %28 = sbr.rel (0) target = $region13
    $region12: #{tpu_custom_call.1} parent=1 // pred_region
      _
    $region13: #{tpu_custom_call.1} parent=1 // pred_fallthru
      _
    // Predicated region
    $region14: #{tpu_custom_call.1} parent=1 // pred_check
      _
    $region15: #{tpu_custom_call.1} parent=1 // pred_check_branch
      %30 = sbr.rel (0) target = $region17
    $region16: #{tpu_custom_call.1} parent=1 // pred_region
      _
    $region17: #{tpu_custom_call.1} parent=1 // pred_fallthru
      _
    // Predicated region
    $region18: #{tpu_custom_call.1} parent=1 // pred_check
      _
    $region19: #{tpu_custom_call.1} parent=1 // pred_check_branch
      %32 = sbr.rel (0) target = $region21
    $region20: #{tpu_custom_call.1} parent=1 // pred_region
      _
    $region21: #{tpu_custom_call.1} parent=1 // pred_fallthru
      _
    // Predicated region
    $region22: #{tpu_custom_call.1} parent=1 // pred_check
      _
    $region23: #{tpu_custom_call.1} parent=1 // pred_check_branch
      %34 = sbr.rel (0) target = $region25
    $region24: #{tpu_custom_call.1} parent=1 // pred_region
      %36 = dma.done [#allocation3], 512
    $region25: #{tpu_custom_call.1} parent=1 // pred_fallthru
      _
    %v37 = vld [vmem:[#allocation2] sm:$0xff]
    %v38 = vld [vmem:[#allocation2 + $0x8] sm:$0xff]
    %v39 = vld [vmem:[#allocation2 + $0x10] sm:$0xff]
    %v40 = vld [vmem:[#allocation2 + $0x18] sm:$0xff]
    %v41 = vadd.f32 %v37, %v38
    %42 = vadd.xlane.f32.xlu0 %v41
    %v43 = vpop.xlane.xlu0 %42
    %v44 = vadd.f32 %v39, %v40
    %45 = vadd.xlane.f32.xlu0 %v44
    %v46 = vpop.xlane.xlu0 %45
    %v47 = vmul.f32 %v43, 0.00390625
    %v48 = vmul.f32 %v46, 0.00390625
    %v49 = vld [vmem:[%s1] sm:$0xff]
    %v50 = vld [vmem:[%s2] sm:$0x1]
    %v52 = vperm.slane %v50, 0
    %v56 = vlaneseq
    %v57 = vand.u32 %v56, 127
    %v58 = vperm.slane %v47, %v57
    %v59 = vperm.slane %v48, %v57
    %vm60 = vcmask 1041409
    %v61 = vsel %vm60, %v59, %v58
    %vm62 = vcmask 64512
    %v63 = vsel %vm62, %v61, 0
    %65 = vmatpush.msra.mxu0 0.0
    %66 = vmatpush.msra.mxu0 0.0
    %67 = vmatpush.msra.mxu0 0.0
    %68 = vmatpush.msra.mxu0 0.0
    %69 = vmatpush.msra.mxu0 0.0
    %70 = vmatpush.msra.mxu0 0.0
    %71 = vmatpush.msra.mxu0 0.0
    %72 = vmatpush.msra.mxu0 0.0
    %73 = vmatpush.msra.mxu0 0.0
    %74 = vmatpush.msra.mxu0 0.0
    %75 = vmatpush.msra.mxu0 0.0
    %76 = vmatpush.msra.mxu0 0.0
    %77 = vmatpush.msra.mxu0 0.0
    %78 = vmatpush.msra.mxu0 0.0
    %79 = vmatpush.msra.mxu0 0.0
    %80 = vmatpush.msra.mxu0 %v49
    %81 = vmatmul.f32.gmra.mxu0 %v63
    %v82 = vpop.f32.mrf.mxu0
    %v83 = vadd.f32 %v52, %v82
    %84 = vdwg.mxu0
    %v85 = vmax.f32 %v83, 0.0
    %v86 = vld [vmem:[%s3] sm:$0x3]
    %v87 = vld [vmem:[%s4] sm:$0x1]
    %v89 = vperm.slane %v87, 0
    %vm91 = vcmask 15360
    %v93 = vsel %vm91, %v85, 0
    %vm95 = vcmask 1041408
    %v97 = vsel %vm95, %v86, 0
    %99 = vmatpush.msra.mxu0 0.0
    %100 = vmatpush.msra.mxu0 0.0
    %101 = vmatpush.msra.mxu0 0.0
    %102 = vmatpush.msra.mxu0 0.0
    %103 = vmatpush.msra.mxu0 0.0
    %104 = vmatpush.msra.mxu0 0.0
    %105 = vmatpush.msra.mxu0 0.0
    %106 = vmatpush.msra.mxu0 0.0
    %107 = vmatpush.msra.mxu0 0.0
    %108 = vmatpush.msra.mxu0 0.0
    %109 = vmatpush.msra.mxu0 0.0
    %110 = vmatpush.msra.mxu0 0.0
    %111 = vmatpush.msra.mxu0 0.0
    %112 = vmatpush.msra.mxu0 0.0
    %113 = vmatpush.msra.mxu0 0.0
    %114 = vmatpush.msra.mxu0 %v97
    %115 = vmatmul.f32.gmra.mxu0 %v93
    %v116 = vpop.f32.mrf.mxu0
    %v117 = vadd.f32 %v89, %v116
    %118 = vdwg.mxu0
    %v119 = vxor.u32 %v117, 2147483648
    %v120 = vmul.f32 %v119, 1.442695
    %v121 = vpow.pop %v120
    %v122 = vadd.f32 %v121, 1.0
    %v123 = vrcp.pop %v122
    %v124 = vmul.f32 %v122, %v123
    %v125 = vsub.f32 1.0, %v124
    %v126 = vmul.f32 %v123, %v125
    %v127 = vadd.f32 %v123, %v126
    %vm128 = vweird.f32 %v122
    %vm129 = vweird.f32 %v123
    %vm130 = vmor %vm128, %vm129
    %v131 = vsel %vm130, %v123, %v127
    %v132 = vand.u32 2147483647, %v122
    %vm133 = vcmp.eq.f32.partialorder %v132, 8.507059e+37
    %v134 = vand.u32 %v122, 2147483648
    %v135 = vor.u32 1.1754944e-38, %v134
    %v136 = vsel %vm133, %v135, %v131
    %v137 = vmul.f32 1.0, %v136
    %v138 = vperm.slane %v137, 0
    %v139 = vlaneseq
    %v140 = vshrl.u32 %v139, 7
    %142 = vset.pattern.permute.xlu0 %v140
    %143 = vperm.xlu0 %142, %v138
    %v144 = vpop.permute.xlu0 %143
    %v145 = vperm.slane %v137, 1
    %v146 = vlaneseq
    %v147 = vshrl.u32 %v146, 7
    %149 = vset.pattern.permute.xlu0 %v147
    %150 = vperm.xlu0 %149, %v145
    %v151 = vpop.permute.xlu0 %150
    %v152 = vmul.f32 %v37, %v144
    %v153 = vmul.f32 %v38, %v144
    %v154 = vmul.f32 %v39, %v151
    %v155 = vmul.f32 %v40, %v151
    %156 = vst [vmem:[#allocation5] sm:$0xff] %v152
    %157 = vst [vmem:[#allocation5 + $0x8] sm:$0xff] %v153
    %158 = vst [vmem:[#allocation5 + $0x10] sm:$0xff] %v154
    %159 = vst [vmem:[#allocation5 + $0x18] sm:$0xff] %v155
    // Predicated region
    $region26: #{tpu_custom_call.1} parent=1 // pred_check
      _
    $region27: #{tpu_custom_call.1} parent=1 // pred_check_branch
      %161 = sbr.rel (0) target = $region29
    $region28: #{tpu_custom_call.1} parent=1 // pred_region
      %163 = vsyncadd [#allocation4], 0
      %s164 = sshll.u32 [#allocation5], 4
      %s165 = int_to_ptr.vmem [resolvable:$true] %s164
      %s166 = sshll.u32 %s5, 4
      %s167 = int_to_ptr.hbm [resolvable:$true] %s166
      %172 = dma.vmem_to_hbm [thread:$0]  %s165, 512, %s167, [#allocation4], 256, 256, 16
    $region29: #{tpu_custom_call.1} parent=1 // pred_fallthru
      _
    // Predicated region
    $region30: #{tpu_custom_call.1} parent=1 // pred_check
      _
    $region31: #{tpu_custom_call.1} parent=1 // pred_check_branch
      %174 = sbr.rel (0) target = $region33
    $region32: #{tpu_custom_call.1} parent=1 // pred_region
      %176 = dma.done [#allocation4], 512
    $region33: #{tpu_custom_call.1} parent=1 // pred_fallthru
      _
    %177 = vsyncpa [#allocation3], 1
    %178 = vsyncpa [#allocation4], 1

</llo_original>
